<compile_context>
chip_gen: v6e
topology: v6e:2x2x1
jax: 0.10.0
libtpu: 0.0.40
codegen_flags: <defaults>
</compile_context>

<pallas_src>
import math

import jax
import jax.numpy as jnp
from jax import lax
from jax.experimental import pallas as pl
from jax.experimental.pallas import tpu as pltpu

_NEG_BIG = -1e30  # "minus infinity" for masked softmax logits (avoids -inf NaNs)


def _round_up(x: int, m: int) -> int:
    return ((x + m - 1) // m) * m


def _pick_tile(total: int, preferred: int, quantum: int) -> int:
    """Largest multiple of `quantum` dividing `total`, at most ~`preferred`."""
    t = min(total, max(quantum, (int(preferred) // quantum) * quantum))
    while total % t:
        t -= quantum
    return t


def _vmem_limit_bytes() -> int:
    """Scoped-VMEM budget: ~3/4 of physical (v5e/v6e: 128 MiB, v7x: 64 MiB)."""
    try:
        cap = pltpu.get_tpu_info().vmem_capacity_bytes
        return int(min(cap * 3 // 4, 100 << 20))
    except Exception:  # conservative fallback if the query is unavailable
        return 48 << 20


def _masked_softmax(logits, valid, axis):
    """Numerically-stable softmax along `axis`; padded entries get 0 probability.

    The per-element divide is replaced by an EUP reciprocal + VPU multiply.
    """
    logits = jnp.where(valid, logits, _NEG_BIG)
    m = jnp.max(logits, axis=axis, keepdims=True)
    ex = jnp.exp(logits - m)
    s = jnp.sum(ex, axis=axis, keepdims=True)
    return ex * pl.reciprocal(s, approx=True)


def hgat_layer_forward(node_features, adjacency_matrix, root_embeddings,
                       weight, weight3):
    """Pallas implementation of HGATLayer.forward.

    Module config reproduced: transfer=True, concat=True, bias=False,
    use_edge=True, eval mode.  root_embeddings is accepted but unused,
    matching the PyTorch reference forward.
    """
    del root_embeddings  # unused in the reference forward pass

    n, in_dim = node_features.shape
    n_a, e = adjacency_matrix.shape
    assert n_a == n, "adjacency_matrix must be [N, E]"
    out_dim = weight.shape[1]

    f32, bf16 = jnp.float32, jnp.bfloat16

    # Lane-dense padded shapes (E / in / out -> multiples of 128; N -> sublane 8).
    n_p = _round_up(n, 8)
    e_p = _round_up(e, 128)
    in_p = _round_up(in_dim, 128)
    out_p = _round_up(out_dim, 128)

    # Tile sizes: keep each f32 A tile around <=8 MiB so the auto
    # double-buffered pipeline fits comfortably even in v7x's 64 MiB VMEM.
    blk_budget = 8 << 20
    te = _pick_tile(e_p, blk_budget // (4 * n_p), 128)   # edge stages: A tile (n_p, te)
    tn = _pick_tile(n_p, blk_budget // (4 * e_p), 8)     # node stages: A tile (tn, e_p)

    # Pad inputs.  A stays f32 (softmax math in f32); pure MXU operands are bf16.
    a_p = jnp.pad(adjacency_matrix.astype(f32), ((0, n_p - n), (0, e_p - e)))
    x_p = jnp.pad(node_features.astype(bf16), ((0, n_p - n), (0, in_p - in_dim)))
    w_p = jnp.pad(weight.astype(bf16), ((0, in_p - in_dim), (0, out_p - out_dim)))
    w3_p = jnp.pad(weight3.astype(bf16),
                   ((0, out_p - out_dim), (0, out_p - out_dim)))

    cparams = pltpu.CompilerParams(
        dimension_semantics=("parallel",),    # shard the grid across TCs (v7x)
        vmem_limit_bytes=_vmem_limit_bytes(),
    )
    a_bytes = 4 * n_p * e_p

    # ---- stage 0: xt = X @ W  (tiled over N) ---------------------------------
    def xt_kernel(x_ref, w_ref, xt_ref):
        xt = jnp.dot(x_ref[...], w_ref[...], preferred_element_type=jnp.float32)
        xt_ref[...] = xt.astype(xt_ref.dtype)

    xt = pl.pallas_call(
        xt_kernel,
        out_shape=jax.ShapeDtypeStruct((n_p, out_p), bf16),
        grid=(n_p // tn,),
        in_specs=[
            pl.BlockSpec((tn, in_p), lambda i: (i, 0)),
            pl.BlockSpec((in_p, out_p), lambda i: (0, 0)),
        ],
        out_specs=pl.BlockSpec((tn, out_p), lambda i: (i, 0)),
        compiler_params=cparams,
        cost_estimate=pl.CostEstimate(
            flops=2 * n_p * in_p * out_p,
            transcendentals=0,
            bytes_accessed=2 * (n_p * in_p + in_p * out_p + n_p * out_p),
        ),
    )(x_p, w_p)

    # ---- stage 1: edge_trans = relu(softmax_N(A)^T @ xt) @ W3  (tiled over E) -
    def edge_kernel(a_ref, xt_ref, w3_ref, et_ref):
        a = a_ref[...]                                              # [n_p, te] f32
        rows = lax.broadcasted_iota(jnp.int32, a.shape, 0)
        p = _masked_softmax(a, rows < n, axis=0)                    # softmax over N
        edge_emb = lax.dot_general(                                 # P^T @ xt
            p.astype(jnp.bfloat16), xt_ref[...],
            dimension_numbers=(((0,), (0,)), ((), ())),
            preferred_element_type=jnp.float32)                     # [te, out_p]
        edge_emb = jnp.maximum(edge_emb, 0.0)                       # relu (dropout=id)
        edge_trans = jnp.dot(edge_emb.astype(jnp.bfloat16), w3_ref[...],
                             preferred_element_type=jnp.float32)
        et_ref[...] = edge_trans.astype(et_ref.dtype)

    edge_trans = pl.pallas_call(
        edge_kernel,
        out_shape=jax.ShapeDtypeStruct((e_p, out_p), bf16),
        grid=(e_p // te,),
        in_specs=[
            pl.BlockSpec((n_p, te), lambda j: (0, j)),
            pl.BlockSpec((n_p, out_p), lambda j: (0, 0)),
            pl.BlockSpec((out_p, out_p), lambda j: (0, 0)),
        ],
        out_specs=pl.BlockSpec((te, out_p), lambda j: (j, 0)),
        compiler_params=cparams,
        cost_estimate=pl.CostEstimate(
            flops=2 * n_p * e_p * out_p + 2 * e_p * out_p * out_p,
            transcendentals=n_p * e_p,
            bytes_accessed=a_bytes + 2 * (n_p * out_p + out_p * out_p + e_p * out_p),
        ),
    )(a_p, xt, w3_p)

    # ---- stage 2: node_attn = relu(softmax_E(A) @ edge_trans)  (tiled over N) -
    def node_kernel(a_ref, et_ref, na_ref):
        a = a_ref[...]                                              # [tn, e_p] f32
        cols = lax.broadcasted_iota(jnp.int32, a.shape, 1)
        p = _masked_softmax(a, cols < e, axis=1)                    # softmax over E
        na = jnp.dot(p.astype(jnp.bfloat16), et_ref[...],
                     preferred_element_type=jnp.float32)
        na_ref[...] = jnp.maximum(na, 0.0).astype(na_ref.dtype)     # relu (concat=True)

    node_attn_p = pl.pallas_call(
        node_kernel,
        out_shape=jax.ShapeDtypeStruct((n_p, out_p), f32),
        grid=(n_p // tn,),
        in_specs=[
            pl.BlockSpec((tn, e_p), lambda i: (i, 0)),
            pl.BlockSpec((e_p, out_p), lambda i: (0, 0)),
        ],
        out_specs=pl.BlockSpec((tn, out_p), lambda i: (i, 0)),
        compiler_params=cparams,
        cost_estimate=pl.CostEstimate(
            flops=2 * n_p * e_p * out_p,
            transcendentals=n_p * e_p,
            bytes_accessed=a_bytes + 2 * e_p * out_p + 4 * n_p * out_p,
        ),
    )(a_p, edge_trans)

    # ---- stage 3: edge_out = relu(softmax_N(A)^T @ node_attn)  (tiled over E) -
    # The over-N softmax is recomputed (one extra read of A + EUP exps) instead
    # of spilling a full softmaxed A^T to HBM (a write + a read).
    def edge_out_kernel(a_ref, na_ref, eo_ref):
        a = a_ref[...]                                              # [n_p, te] f32
        rows = lax.broadcasted_iota(jnp.int32, a.shape, 0)
        p = _masked_softmax(a, rows < n, axis=0)
        eo = lax.dot_general(                                       # P^T @ node_attn
            p.astype(jnp.bfloat16), na_ref[...].astype(jnp.bfloat16),
            dimension_numbers=(((0,), (0,)), ((), ())),
            preferred_element_type=jnp.float32)
        eo_ref[...] = jnp.maximum(eo, 0.0).astype(eo_ref.dtype)

    edge_out_p = pl.pallas_call(
        edge_out_kernel,
        out_shape=jax.ShapeDtypeStruct((e_p, out_p), f32),
        grid=(e_p // te,),
        in_specs=[
            pl.BlockSpec((n_p, te), lambda j: (0, j)),
            pl.BlockSpec((n_p, out_p), lambda j: (0, 0)),
        ],
        out_specs=pl.BlockSpec((te, out_p), lambda j: (j, 0)),
        compiler_params=cparams,
        cost_estimate=pl.CostEstimate(
            flops=2 * n_p * e_p * out_p,
            transcendentals=n_p * e_p,
            bytes_accessed=a_bytes + 4 * n_p * out_p + 4 * e_p * out_p,
        ),
    )(a_p, node_attn_p)

    # Strip the padding back to the caller-visible shapes.
    return node_attn_p[:n, :out_dim], edge_out_p[:e, :out_dim]


hgat_layer_forward = jax.jit(hgat_layer_forward)


def _reference(node_features, adjacency_matrix, weight, weight3):
    """Pure-JAX reference mirroring the PyTorch forward (eval mode) with the
    same bf16-MXU-operand / f32-accumulate policy as the kernels."""
    bf16 = jnp.bfloat16
    dot = lambda a, b: jnp.dot(a.astype(bf16), b.astype(bf16),
                               preferred_element_type=jnp.float32)
    xt = dot(node_features, weight)
    a_t_sm = jax.nn.softmax(adjacency_matrix.T, axis=1)
    edge_emb = jax.nn.relu(dot(a_t_sm, xt))
    edge_trans = dot(edge_emb, weight3)
    a_sm = jax.nn.softmax(adjacency_matrix, axis=1)
    node_attn = jax.nn.relu(dot(a_sm, edge_trans))
    edge_out = jax.nn.relu(dot(a_t_sm, node_attn))
    return node_attn, edge_out


if __name__ == "__main__":
    # Small, deterministic example shapes.
    N = 16          # number of nodes
    E = 8           # number of hyper-edges
    INPUT_DIM = 32
    OUTPUT_DIM = 32

    key = jax.random.PRNGKey(0)
    k_x, k_a, k_r, k_w, k_w3 = jax.random.split(key, 5)

    node_features = jax.random.normal(k_x, (N, INPUT_DIM), dtype=jnp.float32)
    adjacency_matrix = jax.random.normal(k_a, (N, E), dtype=jnp.float32)
    root_embeddings = jax.random.normal(k_r, (N, OUTPUT_DIM), dtype=jnp.float32)

    # Deterministic parameter init matching reset_parameters():
    # uniform(-stdv, stdv), stdv = 1/sqrt(output_dim).
    stdv = 1.0 / math.sqrt(OUTPUT_DIM)
    weight = jax.random.uniform(
        k_w, (INPUT_DIM, OUTPUT_DIM), minval=-stdv, maxval=stdv, dtype=jnp.float32)
    weight3 = jax.random.uniform(
        k_w3, (OUTPUT_DIM, OUTPUT_DIM), minval=-stdv, maxval=stdv, dtype=jnp.float32)

    node_attn, edge_out = hgat_layer_forward(
        node_features, adjacency_matrix, root_embeddings, weight, weight3)
    jax.block_until_ready((node_attn, edge_out))

    # Sanity check against the pure-JAX reference (bf16-matmul tolerance).
    ref_node, ref_edge = _reference(node_features, adjacency_matrix, weight, weight3)
    assert node_attn.shape == (N, OUTPUT_DIM) and edge_out.shape == (E, OUTPUT_DIM)
    assert bool(jnp.all(jnp.isfinite(node_attn))) and bool(jnp.all(jnp.isfinite(edge_out)))
    assert jnp.allclose(node_attn, ref_node, atol=2e-2, rtol=2e-2)
    assert jnp.allclose(edge_out, ref_edge, atol=2e-2, rtol=2e-2)

    print("KERNEL_OK")
</pallas_src>

<mosaic_0001>
module attributes {stable_mosaic.version = 11 : i64} {
  func.func @edge_kernel(%arg0: i32, %arg1: memref<16x128xf32, #tpu.memory_space<vmem>>, %arg2: memref<16x128xbf16, #tpu.memory_space<vmem>>, %arg3: memref<128x128xbf16, #tpu.memory_space<vmem>>, %arg4: memref<128x128xbf16, #tpu.memory_space<vmem>>) attributes {dimension_semantics = [#tpu.dimension_semantics<parallel>], iteration_bounds = array<i64: 1>, scalar_prefetch = 0 : i64, scratch_operands = 0 : i64, tpu.core_type = #tpu.core_type<tc>, window_params = [{transform_indices = @transform_0, window_bounds = array<i64: 16, 128>}, {pipeline_mode = #tpu.pipeline_mode<synchronous>, transform_indices = @transform_1, window_bounds = array<i64: 16, 128>}, {pipeline_mode = #tpu.pipeline_mode<synchronous>, transform_indices = @transform_2, window_bounds = array<i64: 128, 128>}, {transform_indices = @transform_3, window_bounds = array<i64: 128, 128>}]} {
    %c0 = arith.constant 0 : index
    %c0_0 = arith.constant 0 : index
    %0 = vector.load %arg1[%c0, %c0_0] : memref<16x128xf32, #tpu.memory_space<vmem>>, vector<16x128xf32>
    %1 = tpu.iota {dimensions = array<i32: 0>} : vector<16x128xi32>
    %c16_i32 = arith.constant 16 : i32
    %2 = vector.broadcast %c16_i32 : i32 to vector<16x128xi32>
    %3 = arith.cmpi slt, %1, %2 : vector<16x128xi32>
    %cst = arith.constant -1.000000e+30 : f32
    %4 = vector.broadcast %cst : f32 to vector<16x128xf32>
    %5 = arith.select %3, %0, %4 : vector<16x128xi1>, vector<16x128xf32>
    %cst_1 = arith.constant dense<0xFF800000> : vector<128xf32>
    %6 = vector.multi_reduction <maximumf>, %5, %cst_1 [0] : vector<16x128xf32> to vector<128xf32>
    %7 = vector.shape_cast %6 : vector<128xf32> to vector<1x128xf32>
    %8 = vector.broadcast %7 : vector<1x128xf32> to vector<16x128xf32>
    %9 = arith.subf %5, %8 : vector<16x128xf32>
    %10 = math.exp %9 : vector<16x128xf32>
    %cst_2 = arith.constant dense<0.000000e+00> : vector<128xf32>
    %11 = vector.multi_reduction <add>, %10, %cst_2 [0] : vector<16x128xf32> to vector<128xf32>
    %12 = vector.shape_cast %11 : vector<128xf32> to vector<1x128xf32>
    %13 = tpu.reciprocal %12 {approx = true} : vector<1x128xf32> -> vector<1x128xf32>
    %14 = vector.broadcast %13 : vector<1x128xf32> to vector<16x128xf32>
    %15 = arith.mulf %10, %14 : vector<16x128xf32>
    %16 = arith.truncf %15 : vector<16x128xf32> to vector<16x128xbf16>
    %c0_3 = arith.constant 0 : index
    %c0_4 = arith.constant 0 : index
    %17 = vector.load %arg2[%c0_3, %c0_4] : memref<16x128xbf16, #tpu.memory_space<vmem>>, vector<16x128xbf16>
    %cst_5 = arith.constant dense<0.000000e+00> : vector<128x128xf32>
    %18 = tpu.matmul %16, %17, %cst_5 {dimension_numbers = #tpu.dot_dimension_numbers<[0], [0], [1], [1], [0, 1, 1, 1], [], []>} : vector<16x128xbf16>, vector<16x128xbf16>, vector<128x128xf32> -> vector<128x128xf32>
    %cst_6 = arith.constant 0.000000e+00 : f32
    %19 = vector.broadcast %cst_6 : f32 to vector<128x128xf32>
    %20 = arith.maximumf %18, %19 : vector<128x128xf32>
    %21 = arith.truncf %20 : vector<128x128xf32> to vector<128x128xbf16>
    %c0_7 = arith.constant 0 : index
    %c0_8 = arith.constant 0 : index
    %22 = vector.load %arg3[%c0_7, %c0_8] : memref<128x128xbf16, #tpu.memory_space<vmem>>, vector<128x128xbf16>
    %cst_9 = arith.constant dense<0.000000e+00> : vector<128x128xf32>
    %23 = tpu.matmul %21, %22, %cst_9 {dimension_numbers = #tpu.dot_dimension_numbers<[1], [0], [0], [1], [0, 0, 1, 1], [], []>} : vector<128x128xbf16>, vector<128x128xbf16>, vector<128x128xf32> -> vector<128x128xf32>
    %24 = arith.truncf %23 : vector<128x128xf32> to vector<128x128xbf16>
    %c0_10 = arith.constant 0 : index
    %c0_11 = arith.constant 0 : index
    %25 = vector.load %arg4[%c0_10, %c0_11] : memref<128x128xbf16, #tpu.memory_space<vmem>>, vector<128x128xbf16>
    tpu.vector_store %arg4[%c0_10, %c0_11], %24 {strides = array<i32>} : memref<128x128xbf16, #tpu.memory_space<vmem>>, vector<128x128xbf16>,
    return
  }
  func.func @transform_0(%arg0: i32) -> (i32, i32) {
    %c0_i32 = arith.constant 0 : i32
    %c0_i32_0 = arith.constant 0 : i32
    return %c0_i32, %arg0 : i32, i32
  }
  func.func @transform_1(%arg0: i32) -> (i32, i32) {
    %c0_i32 = arith.constant 0 : i32
    %c0_i32_0 = arith.constant 0 : i32
    %c0_i32_1 = arith.constant 0 : i32
    return %c0_i32, %c0_i32_0 : i32, i32
  }
  func.func @transform_2(%arg0: i32) -> (i32, i32) {
    %c0_i32 = arith.constant 0 : i32
    %c0_i32_0 = arith.constant 0 : i32
    %c0_i32_1 = arith.constant 0 : i32
    return %c0_i32, %c0_i32_0 : i32, i32
  }
  func.func @transform_3(%arg0: i32) -> (i32, i32) {
    %c0_i32 = arith.constant 0 : i32
    %c0_i32_0 = arith.constant 0 : i32
    return %arg0, %c0_i32 : i32, i32
  }
}

module attributes {stable_mosaic.version = 11 : i64} {
  func.func @node_kernel(%arg0: i32, %arg1: memref<16x128xf32, #tpu.memory_space<vmem>>, %arg2: memref<128x128xbf16, #tpu.memory_space<vmem>>, %arg3: memref<16x128xf32, #tpu.memory_space<vmem>>) attributes {dimension_semantics = [#tpu.dimension_semantics<parallel>], iteration_bounds = array<i64: 1>, scalar_prefetch = 0 : i64, scratch_operands = 0 : i64, tpu.core_type = #tpu.core_type<tc>, window_params = [{transform_indices = @transform_0, window_bounds = array<i64: 16, 128>}, {pipeline_mode = #tpu.pipeline_mode<synchronous>, transform_indices = @transform_1, window_bounds = array<i64: 128, 128>}, {transform_indices = @transform_2, window_bounds = array<i64: 16, 128>}]} {
    %c0 = arith.constant 0 : index
    %c0_0 = arith.constant 0 : index
    %0 = vector.load %arg1[%c0, %c0_0] : memref<16x128xf32, #tpu.memory_space<vmem>>, vector<16x128xf32>
    %1 = tpu.iota {dimensions = array<i32: 1>} : vector<16x128xi32>
    %c8_i32 = arith.constant 8 : i32
    %2 = vector.broadcast %c8_i32 : i32 to vector<16x128xi32>
    %3 = arith.cmpi slt, %1, %2 : vector<16x128xi32>
    %cst = arith.constant -1.000000e+30 : f32
    %4 = vector.broadcast %cst : f32 to vector<16x128xf32>
    %5 = arith.select %3, %0, %4 : vector<16x128xi1>, vector<16x128xf32>
    %cst_1 = arith.constant dense<0xFF800000> : vector<16xf32>
    %6 = vector.multi_reduction <maximumf>, %5, %cst_1 [1] : vector<16x128xf32> to vector<16xf32>
    %7 = vector.shape_cast %6 : vector<16xf32> to vector<16x1xf32>
    %8 = vector.broadcast %7 : vector<16x1xf32> to vector<16x128xf32>
    %9 = arith.subf %5, %8 : vector<16x128xf32>
    %10 = math.exp %9 : vector<16x128xf32>
    %cst_2 = arith.constant dense<0.000000e+00> : vector<16xf32>
    %11 = vector.multi_reduction <add>, %10, %cst_2 [1] : vector<16x128xf32> to vector<16xf32>
    %12 = vector.shape_cast %11 : vector<16xf32> to vector<16x1xf32>
    %13 = tpu.reciprocal %12 {approx = true} : vector<16x1xf32> -> vector<16x1xf32>
    %14 = vector.broadcast %13 : vector<16x1xf32> to vector<16x128xf32>
    %15 = arith.mulf %10, %14 : vector<16x128xf32>
    %16 = arith.truncf %15 : vector<16x128xf32> to vector<16x128xbf16>
    %c0_3 = arith.constant 0 : index
    %c0_4 = arith.constant 0 : index
    %17 = vector.load %arg2[%c0_3, %c0_4] : memref<128x128xbf16, #tpu.memory_space<vmem>>, vector<128x128xbf16>
    %cst_5 = arith.constant dense<0.000000e+00> : vector<16x128xf32>
    %18 = tpu.matmul %16, %17, %cst_5 {dimension_numbers = #tpu.dot_dimension_numbers<[1], [0], [0], [1], [0, 0, 1, 1], [], []>} : vector<16x128xbf16>, vector<128x128xbf16>, vector<16x128xf32> -> vector<16x128xf32>
    %cst_6 = arith.constant 0.000000e+00 : f32
    %19 = vector.broadcast %cst_6 : f32 to vector<16x128xf32>
    %20 = arith.maximumf %18, %19 : vector<16x128xf32>
    %c0_7 = arith.constant 0 : index
    %c0_8 = arith.constant 0 : index
    %21 = vector.load %arg3[%c0_7, %c0_8] : memref<16x128xf32, #tpu.memory_space<vmem>>, vector<16x128xf32>
    tpu.vector_store %arg3[%c0_7, %c0_8], %20 {strides = array<i32>} : memref<16x128xf32, #tpu.memory_space<vmem>>, vector<16x128xf32>,
    return
  }
  func.func @transform_0(%arg0: i32) -> (i32, i32) {
    %c0_i32 = arith.constant 0 : i32
    %c0_i32_0 = arith.constant 0 : i32
    return %arg0, %c0_i32 : i32, i32
  }
  func.func @transform_1(%arg0: i32) -> (i32, i32) {
    %c0_i32 = arith.constant 0 : i32
    %c0_i32_0 = arith.constant 0 : i32
    %c0_i32_1 = arith.constant 0 : i32
    return %c0_i32, %c0_i32_0 : i32, i32
  }
  func.func @transform_2(%arg0: i32) -> (i32, i32) {
    %c0_i32 = arith.constant 0 : i32
    %c0_i32_0 = arith.constant 0 : i32
    return %arg0, %c0_i32 : i32, i32
  }
}

module attributes {stable_mosaic.version = 11 : i64} {
  func.func @edge_out_kernel(%arg0: i32, %arg1: memref<16x128xf32, #tpu.memory_space<vmem>>, %arg2: memref<16x128xf32, #tpu.memory_space<vmem>>, %arg3: memref<128x128xf32, #tpu.memory_space<vmem>>) attributes {dimension_semantics = [#tpu.dimension_semantics<parallel>], iteration_bounds = array<i64: 1>, scalar_prefetch = 0 : i64, scratch_operands = 0 : i64, tpu.core_type = #tpu.core_type<tc>, window_params = [{transform_indices = @transform_0, window_bounds = array<i64: 16, 128>}, {pipeline_mode = #tpu.pipeline_mode<synchronous>, transform_indices = @transform_1, window_bounds = array<i64: 16, 128>}, {transform_indices = @transform_2, window_bounds = array<i64: 128, 128>}]} {
    %c0 = arith.constant 0 : index
    %c0_0 = arith.constant 0 : index
    %0 = vector.load %arg1[%c0, %c0_0] : memref<16x128xf32, #tpu.memory_space<vmem>>, vector<16x128xf32>
    %1 = tpu.iota {dimensions = array<i32: 0>} : vector<16x128xi32>
    %c16_i32 = arith.constant 16 : i32
    %2 = vector.broadcast %c16_i32 : i32 to vector<16x128xi32>
    %3 = arith.cmpi slt, %1, %2 : vector<16x128xi32>
    %cst = arith.constant -1.000000e+30 : f32
    %4 = vector.broadcast %cst : f32 to vector<16x128xf32>
    %5 = arith.select %3, %0, %4 : vector<16x128xi1>, vector<16x128xf32>
    %cst_1 = arith.constant dense<0xFF800000> : vector<128xf32>
    %6 = vector.multi_reduction <maximumf>, %5, %cst_1 [0] : vector<16x128xf32> to vector<128xf32>
    %7 = vector.shape_cast %6 : vector<128xf32> to vector<1x128xf32>
    %8 = vector.broadcast %7 : vector<1x128xf32> to vector<16x128xf32>
    %9 = arith.subf %5, %8 : vector<16x128xf32>
    %10 = math.exp %9 : vector<16x128xf32>
    %cst_2 = arith.constant dense<0.000000e+00> : vector<128xf32>
    %11 = vector.multi_reduction <add>, %10, %cst_2 [0] : vector<16x128xf32> to vector<128xf32>
    %12 = vector.shape_cast %11 : vector<128xf32> to vector<1x128xf32>
    %13 = tpu.reciprocal %12 {approx = true} : vector<1x128xf32> -> vector<1x128xf32>
    %14 = vector.broadcast %13 : vector<1x128xf32> to vector<16x128xf32>
    %15 = arith.mulf %10, %14 : vector<16x128xf32>
    %16 = arith.truncf %15 : vector<16x128xf32> to vector<16x128xbf16>
    %c0_3 = arith.constant 0 : index
    %c0_4 = arith.constant 0 : index
    %17 = vector.load %arg2[%c0_3, %c0_4] : memref<16x128xf32, #tpu.memory_space<vmem>>, vector<16x128xf32>
    %18 = arith.truncf %17 : vector<16x128xf32> to vector<16x128xbf16>
    %cst_5 = arith.constant dense<0.000000e+00> : vector<128x128xf32>
    %19 = tpu.matmul %16, %18, %cst_5 {dimension_numbers = #tpu.dot_dimension_numbers<[0], [0], [1], [1], [0, 1, 1, 1], [], []>} : vector<16x128xbf16>, vector<16x128xbf16>, vector<128x128xf32> -> vector<128x128xf32>
    %cst_6 = arith.constant 0.000000e+00 : f32
    %20 = vector.broadcast %cst_6 : f32 to vector<128x128xf32>
    %21 = arith.maximumf %19, %20 : vector<128x128xf32>
    %c0_7 = arith.constant 0 : index
    %c0_8 = arith.constant 0 : index
    %22 = vector.load %arg3[%c0_7, %c0_8] : memref<128x128xf32, #tpu.memory_space<vmem>>, vector<128x128xf32>
    tpu.vector_store %arg3[%c0_7, %c0_8], %21 {strides = array<i32>} : memref<128x128xf32, #tpu.memory_space<vmem>>, vector<128x128xf32>,
    return
  }
  func.func @transform_0(%arg0: i32) -> (i32, i32) {
    %c0_i32 = arith.constant 0 : i32
    %c0_i32_0 = arith.constant 0 : i32
    return %c0_i32, %arg0 : i32, i32
  }
  func.func @transform_1(%arg0: i32) -> (i32, i32) {
    %c0_i32 = arith.constant 0 : i32
    %c0_i32_0 = arith.constant 0 : i32
    %c0_i32_1 = arith.constant 0 : i32
    return %c0_i32, %c0_i32_0 : i32, i32
  }
  func.func @transform_2(%arg0: i32) -> (i32, i32) {
    %c0_i32 = arith.constant 0 : i32
    %c0_i32_0 = arith.constant 0 : i32
    return %arg0, %c0_i32 : i32, i32
  }
}

module attributes {stable_mosaic.version = 11 : i64} {
  func.func @xt_kernel(%arg0: i32, %arg1: memref<16x128xbf16, #tpu.memory_space<vmem>>, %arg2: memref<128x128xbf16, #tpu.memory_space<vmem>>, %arg3: memref<16x128xbf16, #tpu.memory_space<vmem>>) attributes {dimension_semantics = [#tpu.dimension_semantics<parallel>], iteration_bounds = array<i64: 1>, scalar_prefetch = 0 : i64, scratch_operands = 0 : i64, tpu.core_type = #tpu.core_type<tc>, window_params = [{transform_indices = @transform_0, window_bounds = array<i64: 16, 128>}, {pipeline_mode = #tpu.pipeline_mode<synchronous>, transform_indices = @transform_1, window_bounds = array<i64: 128, 128>}, {transform_indices = @transform_2, window_bounds = array<i64: 16, 128>}]} {
    %c0 = arith.constant 0 : index
    %c0_0 = arith.constant 0 : index
    %0 = vector.load %arg1[%c0, %c0_0] : memref<16x128xbf16, #tpu.memory_space<vmem>>, vector<16x128xbf16>
    %c0_1 = arith.constant 0 : index
    %c0_2 = arith.constant 0 : index
    %1 = vector.load %arg2[%c0_1, %c0_2] : memref<128x128xbf16, #tpu.memory_space<vmem>>, vector<128x128xbf16>
    %cst = arith.constant dense<0.000000e+00> : vector<16x128xf32>
    %2 = tpu.matmul %0, %1, %cst {dimension_numbers = #tpu.dot_dimension_numbers<[1], [0], [0], [1], [0, 0, 1, 1], [], []>} : vector<16x128xbf16>, vector<128x128xbf16>, vector<16x128xf32> -> vector<16x128xf32>
    %3 = arith.truncf %2 : vector<16x128xf32> to vector<16x128xbf16>
    %c0_3 = arith.constant 0 : index
    %c0_4 = arith.constant 0 : index
    %4 = vector.load %arg3[%c0_3, %c0_4] : memref<16x128xbf16, #tpu.memory_space<vmem>>, vector<16x128xbf16>
    tpu.vector_store %arg3[%c0_3, %c0_4], %3 {strides = array<i32>} : memref<16x128xbf16, #tpu.memory_space<vmem>>, vector<16x128xbf16>,
    return
  }
  func.func @transform_0(%arg0: i32) -> (i32, i32) {
    %c0_i32 = arith.constant 0 : i32
    %c0_i32_0 = arith.constant 0 : i32
    return %arg0, %c0_i32 : i32, i32
  }
  func.func @transform_1(%arg0: i32) -> (i32, i32) {
    %c0_i32 = arith.constant 0 : i32
    %c0_i32_0 = arith.constant 0 : i32
    %c0_i32_1 = arith.constant 0 : i32
    return %c0_i32, %c0_i32_0 : i32, i32
  }
  func.func @transform_2(%arg0: i32) -> (i32, i32) {
    %c0_i32 = arith.constant 0 : i32
    %c0_i32_0 = arith.constant 0 : i32
    return %arg0, %c0_i32 : i32, i32
  }
}

</mosaic_0001>

<llo_original>
// kernel: hgat_layer_forward.7
$region0: #{hgat_layer_forward.7}
  #allocation0 [shape = 'u32[]', space=smem, size = 0x4, offset = 0x4, fixed_abs, tag = 'smem constant byte address 0x4 - core index']
  #allocation1 [shape = 'u32[144,128]{1,0:T(1,128)}', space=vmem, size = 0x12000, scoped, tag = 'internal scratch']
  %s0 = inlined_call_operand.vmem [shape: f32[16,128], index: 0, kind: input, shape index: {}]
  %s1 = inlined_call_operand.vmem [shape: f32[16,128], index: 1, kind: input, shape index: {}]
  %s2 = inlined_call_operand.vmem [shape: f32[128,128], index: 2, kind: output, shape index: {}]
  %s3 = sld [smem:[#allocation0]]
  $region18: #{hgat_layer_forward.7} parent=0
    _
  %s5 = ssub.s32 1, %s3
  %s6 = scalar_select 0, %s5, %s3
  // Predicated region
  $region2: #{hgat_layer_forward.7} parent=0 // pred_check
    _
  $region3: #{hgat_layer_forward.7} parent=0 // pred_check_branch
    %8 = sbr.rel (0) target = $region5
  $region4: #{hgat_layer_forward.7} parent=0 // pred_region
    _
  $region5: #{hgat_layer_forward.7} parent=0 // pred_fallthru
    _
  // Predicated region
  $region6: #{hgat_layer_forward.7} parent=0 // pred_check
    _
  $region7: #{hgat_layer_forward.7} parent=0 // pred_check_branch
    %10 = sbr.rel (0) target = $region9
  $region8: #{hgat_layer_forward.7} parent=0 // pred_region
    _
  $region9: #{hgat_layer_forward.7} parent=0 // pred_fallthru
    _
  %v12 = vld [vmem:[%s0] sm:$0xff]
  %v13 = vld [vmem:[%s0 + $0x8] sm:$0xff]
  %v14 = vlaneseq
  %v15 = vshrl.u32 %v14, 7
  %v16 = vadd.s32 %v15, 8
  %vm17 = vcmp.lt.s32.totalorder %v15, 16
  %vm18 = vcmp.lt.s32.totalorder %v16, 16
  %v19 = vsel %vm17, %v12, -1e+30
  %v20 = vsel %vm18, %v13, -1e+30
  %v21 = vmax.f32 %v19, %v20
  %v22 = vrot.slane %v21, 4
  %v23 = vmax.f32 %v21, %v22
  %v24 = vrot.slane %v23, 2
  %v25 = vmax.f32 %v23, %v24
  %v26 = vrot.slane %v25, 1
  %v27 = vmax.f32 %v25, %v26
  %v28 = vsub.f32 %v19, %v27
  %v29 = vsub.f32 %v20, %v27
  %v30 = vmul.f32 %v28, 1.442695
  %v31 = vpow.pop %v30
  %v32 = vmul.f32 %v29, 1.442695
  %v33 = vpow.pop %v32
  %v34 = vadd.f32 %v31, %v33
  %v35 = vrot.slane %v34, 4
  %v36 = vadd.f32 %v34, %v35
  %v37 = vrot.slane %v36, 2
  %v38 = vadd.f32 %v36, %v37
  %v39 = vrot.slane %v38, 1
  %v40 = vadd.f32 %v38, %v39
  %v41 = vrcp.pop %v40
  %v42 = vmul.f32 %v31, %v41
  %v43 = vmul.f32 %v33, %v41
  %v44 = vpack.c.bf16 %v43, %v42
  %v45 = vld [vmem:[%s1] sm:$0xff]
  %v46 = vld [vmem:[%s1 + $0x8] sm:$0xff]
  %v47 = vpack.c.bf16 %v46, %v45
  %48 = vxpose.xlu0.c.b16.start [1/8] %v44, 128
  %49 = vxpose.xlu0.c.b16.cont [2/8] 0, 128
  %50 = vxpose.xlu0.c.b16.cont [3/8] 0, 128
  %51 = vxpose.xlu0.c.b16.cont [4/8] 0, 128
  %52 = vxpose.xlu0.c.b16.cont [5/8] 0, 128
  %53 = vxpose.xlu0.c.b16.cont [6/8] 0, 128
  %54 = vxpose.xlu0.c.b16.cont [7/8] 0, 128
  %55 = vxpose.xlu0.c.b16.end [8/8] 0, 128
  %v56 = vpop.trf.xlu0
  %v57 = vpop.trf.xlu0
  %v58 = vpop.trf.xlu0
  %v59 = vpop.trf.xlu0
  %v60 = vpop.trf.xlu0
  %v61 = vpop.trf.xlu0
  %v62 = vpop.trf.xlu0
  %v63 = vpop.trf.xlu0
  %vm64 = vcmask 130048
  %v66 = vsel %vm64, %v56, 0
  %v69 = vsel %vm64, %v57, 0
  %v72 = vsel %vm64, %v58, 0
  %v75 = vsel %vm64, %v59, 0
  %v78 = vsel %vm64, %v60, 0
  %v81 = vsel %vm64, %v61, 0
  %v84 = vsel %vm64, %v62, 0
  %v87 = vsel %vm64, %v63, 0
  %89 = vmatprep.subr.bf16.mxu0 0
  %90 = vmatpush1.bf16.msra.mxu0 0
  %91 = vmatprep.subr.bf16.mxu0 0
  %92 = vmatpush1.bf16.msra.mxu0 0
  %93 = vmatprep.subr.bf16.mxu0 0
  %94 = vmatpush1.bf16.msra.mxu0 0
  %95 = vmatprep.subr.bf16.mxu0 0
  %96 = vmatpush1.bf16.msra.mxu0 0
  %97 = vmatprep.subr.bf16.mxu0 0
  %98 = vmatpush1.bf16.msra.mxu0 0
  %99 = vmatprep.subr.bf16.mxu0 0
  %100 = vmatpush1.bf16.msra.mxu0 0
  %101 = vmatprep.subr.bf16.mxu0 0
  %102 = vmatpush1.bf16.msra.mxu0 0
  %103 = vmatprep.subr.bf16.mxu0 0
  %104 = vmatpush1.bf16.msra.mxu0 %v47
  %105 = vmatprep.subr.bf16.mxu0 0
  %106 = vmatpush2.bf16.msra.mxu0 0
  %107 = vmatprep.subr.bf16.mxu0 0
  %108 = vmatpush2.bf16.msra.mxu0 0
  %109 = vmatprep.subr.bf16.mxu0 0
  %110 = vmatpush2.bf16.msra.mxu0 0
  %111 = vmatprep.subr.bf16.mxu0 0
  %112 = vmatpush2.bf16.msra.mxu0 0
  %113 = vmatprep.subr.bf16.mxu0 0
  %114 = vmatpush2.bf16.msra.mxu0 0
  %115 = vmatprep.subr.bf16.mxu0 0
  %116 = vmatpush2.bf16.msra.mxu0 0
  %117 = vmatprep.subr.bf16.mxu0 0
  %118 = vmatpush2.bf16.msra.mxu0 0
  %119 = vmatprep.subr.bf16.mxu0 0
  %120 = vmatpush2.bf16.msra.mxu0 0
  %121 = vmatprep.mubr.bf16.mxu0 0
  %122 = vmatmul.mubr.bf16.gmra.mxu0 %v66
  %v123 = vpop.f32.mrf.mxu0
  %v124 = vadd.f32 0.0, %v123
  %v125 = vpop.f32.mrf.mxu0
  %v126 = vpop.f32.mrf.mxu0
  %v127 = vadd.f32 0.0, %v126
  %v128 = vpop.f32.mrf.mxu0
  %129 = vmatprep.mubr.bf16.mxu0 0
  %130 = vmatmul.mubr.bf16.gmra.mxu0 %v69
  %v131 = vpop.f32.mrf.mxu0
  %v132 = vadd.f32 0.0, %v131
  %v133 = vpop.f32.mrf.mxu0
  %v134 = vpop.f32.mrf.mxu0
  %v135 = vadd.f32 0.0, %v134
  %v136 = vpop.f32.mrf.mxu0
  %137 = vmatprep.mubr.bf16.mxu0 0
  %138 = vmatmul.mubr.bf16.gmra.mxu0 %v72
  %v139 = vpop.f32.mrf.mxu0
  %v140 = vadd.f32 0.0, %v139
  %v141 = vpop.f32.mrf.mxu0
  %v142 = vpop.f32.mrf.mxu0
  %v143 = vadd.f32 0.0, %v142
  %v144 = vpop.f32.mrf.mxu0
  %145 = vmatprep.mubr.bf16.mxu0 0
  %146 = vmatmul.mubr.bf16.gmra.mxu0 %v75
  %v147 = vpop.f32.mrf.mxu0
  %v148 = vadd.f32 0.0, %v147
  %v149 = vpop.f32.mrf.mxu0
  %v150 = vpop.f32.mrf.mxu0
  %v151 = vadd.f32 0.0, %v150
  %v152 = vpop.f32.mrf.mxu0
  %153 = vmatprep.mubr.bf16.mxu0 0
  %154 = vmatmul.mubr.bf16.gmra.mxu0 %v78
  %v155 = vpop.f32.mrf.mxu0
  %v156 = vadd.f32 0.0, %v155
  %v157 = vpop.f32.mrf.mxu0
  %v158 = vpop.f32.mrf.mxu0
  %v159 = vadd.f32 0.0, %v158
  %v160 = vpop.f32.mrf.mxu0
  %161 = vmatprep.mubr.bf16.mxu0 0
  %162 = vmatmul.mubr.bf16.gmra.mxu0 %v81
  %v163 = vpop.f32.mrf.mxu0
  %v164 = vadd.f32 0.0, %v163
  %v165 = vpop.f32.mrf.mxu0
  %v166 = vpop.f32.mrf.mxu0
  %v167 = vadd.f32 0.0, %v166
  %v168 = vpop.f32.mrf.mxu0
  %169 = vmatprep.mubr.bf16.mxu0 0
  %170 = vmatmul.mubr.bf16.gmra.mxu0 %v84
  %v171 = vpop.f32.mrf.mxu0
  %v172 = vadd.f32 0.0, %v171
  %v173 = vpop.f32.mrf.mxu0
  %v174 = vpop.f32.mrf.mxu0
  %v175 = vadd.f32 0.0, %v174
  %v176 = vpop.f32.mrf.mxu0
  %177 = vmatprep.mubr.bf16.mxu0 0
  %178 = vmatmul.mubr.bf16.gmra.mxu0 %v87
  %v179 = vpop.f32.mrf.mxu0
  %v180 = vadd.f32 0.0, %v179
  %v181 = vpop.f32.mrf.mxu0
  %v182 = vpop.f32.mrf.mxu0
  %v183 = vadd.f32 0.0, %v182
  %v184 = vpop.f32.mrf.mxu0
  %185 = vdwg.mxu0
  %v186 = vmax.f32 %v124, 0.0
  %v187 = vmax.f32 %v127, 0.0
  %v188 = vmax.f32 %v132, 0.0
  %v189 = vmax.f32 %v135, 0.0
  %v190 = vmax.f32 %v140, 0.0
  %v191 = vmax.f32 %v143, 0.0
  %v192 = vmax.f32 %v148, 0.0
  %v193 = vmax.f32 %v151, 0.0
  %v194 = vmax.f32 %v156, 0.0
  %v195 = vmax.f32 %v159, 0.0
  %v196 = vmax.f32 %v164, 0.0
  %v197 = vmax.f32 %v167, 0.0
  %v198 = vmax.f32 %v172, 0.0
  %v199 = vmax.f32 %v175, 0.0
  %v200 = vmax.f32 %v180, 0.0
  %v201 = vmax.f32 %v183, 0.0
  %202 = vst [vmem:[%s2] sm:$0xff] %v186
  %203 = vst [vmem:[%s2 + $0x8] sm:$0xff] %v187
  %204 = vst [vmem:[%s2 + $0x10] sm:$0xff] %v188
  %205 = vst [vmem:[%s2 + $0x18] sm:$0xff] %v189
  %206 = vst [vmem:[%s2 + $0x20] sm:$0xff] %v190
  %207 = vst [vmem:[%s2 + $0x28] sm:$0xff] %v191
  %208 = vst [vmem:[%s2 + $0x30] sm:$0xff] %v192
  %209 = vst [vmem:[%s2 + $0x38] sm:$0xff] %v193
  %210 = vst [vmem:[%s2 + $0x40] sm:$0xff] %v194
  %211 = vst [vmem:[%s2 + $0x48] sm:$0xff] %v195
  %212 = vst [vmem:[%s2 + $0x50] sm:$0xff] %v196
  %213 = vst [vmem:[%s2 + $0x58] sm:$0xff] %v197
  %214 = vst [vmem:[%s2 + $0x60] sm:$0xff] %v198
  %215 = vst [vmem:[%s2 + $0x68] sm:$0xff] %v199
  %216 = vst [vmem:[%s2 + $0x70] sm:$0xff] %v200
  %217 = vst [vmem:[%s2 + $0x78] sm:$0xff] %v201
  // Predicated region
  $region10: #{hgat_layer_forward.7} parent=0 // pred_check
    _
  $region11: #{hgat_layer_forward.7} parent=0 // pred_check_branch
    %219 = sbr.rel (0) target = $region13
  $region12: #{hgat_layer_forward.7} parent=0 // pred_region
    _
  $region13: #{hgat_layer_forward.7} parent=0 // pred_fallthru
    _
  // Predicated region
  $region14: #{hgat_layer_forward.7} parent=0 // pred_check
    _
  $region15: #{hgat_layer_forward.7} parent=0 // pred_check_branch
    %221 = sbr.rel (0) target = $region17
  $region16: #{hgat_layer_forward.7} parent=0 // pred_region
    _
  $region17: #{hgat_layer_forward.7} parent=0 // pred_fallthru
    _

// kernel: hgat_layer_forward.6
$region0: #{hgat_layer_forward.6}
  #allocation0 [shape = 'u32[]', space=smem, size = 0x4, offset = 0x4, fixed_abs, tag = 'smem constant byte address 0x4 - core index']
  #allocation1 [shape = 'u32[144,128]{1,0:T(1,128)}', space=vmem, size = 0x12000, scoped, tag = 'internal scratch']
  %s0 = inlined_call_operand.vmem [shape: f32[16,128], index: 0, kind: input, shape index: {}]
  %s1 = inlined_call_operand.vmem [shape: bf16[128,128], index: 1, kind: input, shape index: {}]
  %s2 = inlined_call_operand.vmem [shape: f32[16,128], index: 2, kind: output, shape index: {}]
  %s3 = sld [smem:[#allocation0]]
  $region18: #{hgat_layer_forward.6} parent=0
    _
  %s5 = ssub.s32 1, %s3
  %s6 = scalar_select 0, %s5, %s3
  // Predicated region
  $region2: #{hgat_layer_forward.6} parent=0 // pred_check
    _
  $region3: #{hgat_layer_forward.6} parent=0 // pred_check_branch
    %8 = sbr.rel (0) target = $region5
  $region4: #{hgat_layer_forward.6} parent=0 // pred_region
    _
  $region5: #{hgat_layer_forward.6} parent=0 // pred_fallthru
    _
  // Predicated region
  $region6: #{hgat_layer_forward.6} parent=0 // pred_check
    _
  $region7: #{hgat_layer_forward.6} parent=0 // pred_check_branch
    %10 = sbr.rel (0) target = $region9
  $region8: #{hgat_layer_forward.6} parent=0 // pred_region
    _
  $region9: #{hgat_layer_forward.6} parent=0 // pred_fallthru
    _
  %v12 = vld [vmem:[%s0] sm:$0xff]
  %v13 = vld [vmem:[%s0 + $0x8] sm:$0xff]
  %v14 = vlaneseq
  %v15 = vand.u32 %v14, 127
  %vm16 = vcmp.lt.s32.totalorder %v15, 8
  %v17 = vsel %vm16, %v12, -1e+30
  %v18 = vsel %vm16, %v13, -1e+30
  %19 = vmax.xlane.f32.xlu0 %v17
  %v20 = vpop.xlane.xlu0 %19
  %21 = vmax.xlane.f32.xlu0 %v18
  %v22 = vpop.xlane.xlu0 %21
  %v23 = vsub.f32 %v17, %v20
  %v24 = vsub.f32 %v18, %v22
  %v25 = vmul.f32 %v23, 1.442695
  %v26 = vpow.pop %v25
  %v27 = vmul.f32 %v24, 1.442695
  %v28 = vpow.pop %v27
  %29 = vadd.xlane.f32.xlu0 %v26
  %v30 = vpop.xlane.xlu0 %29
  %31 = vadd.xlane.f32.xlu0 %v28
  %v32 = vpop.xlane.xlu0 %31
  %v33 = vrcp.pop %v30
  %v34 = vrcp.pop %v32
  %v35 = vmul.f32 %v26, %v33
  %v36 = vmul.f32 %v28, %v34
  %v37 = vpack.c.bf16 %v36, %v35
  %v38 = vld [vmem:[%s1] sm:$0xf]
  %v39 = vld [vmem:[%s1 + $0x4] sm:$0xf]
  %v40 = vld [vmem:[%s1 + $0x8] sm:$0xf]
  %v41 = vld [vmem:[%s1 + $0xc] sm:$0xf]
  %v42 = vld [vmem:[%s1 + $0x10] sm:$0xf]
  %v43 = vld [vmem:[%s1 + $0x14] sm:$0xf]
  %v44 = vld [vmem:[%s1 + $0x18] sm:$0xf]
  %v45 = vld [vmem:[%s1 + $0x1c] sm:$0xf]
  %v46 = vld [vmem:[%s1 + $0x20] sm:$0xf]
  %v47 = vld [vmem:[%s1 + $0x24] sm:$0xf]
  %v48 = vld [vmem:[%s1 + $0x28] sm:$0xf]
  %v49 = vld [vmem:[%s1 + $0x2c] sm:$0xf]
  %v50 = vld [vmem:[%s1 + $0x30] sm:$0xf]
  %v51 = vld [vmem:[%s1 + $0x34] sm:$0xf]
  %v52 = vld [vmem:[%s1 + $0x38] sm:$0xf]
  %v53 = vld [vmem:[%s1 + $0x3c] sm:$0xf]
  %v70 = vunpack.c.l.b16 %v38
  %v71 = vunpack.c.l.b16 %v39
  %v72 = vunpack.c.l.b16 %v40
  %v73 = vunpack.c.l.b16 %v41
  %v74 = vunpack.c.l.b16 %v42
  %v75 = vunpack.c.l.b16 %v43
  %v76 = vunpack.c.l.b16 %v44
  %v77 = vunpack.c.l.b16 %v45
  %v78 = vunpack.c.l.b16 %v46
  %v79 = vunpack.c.l.b16 %v47
  %v80 = vunpack.c.l.b16 %v48
  %v81 = vunpack.c.l.b16 %v49
  %v82 = vunpack.c.l.b16 %v50
  %v83 = vunpack.c.l.b16 %v51
  %v84 = vunpack.c.l.b16 %v52
  %v85 = vunpack.c.l.b16 %v53
  %v86 = vpack.c.b16 %v71, %v70
  %v87 = vpack.c.b16 %v73, %v72
  %v88 = vpack.c.b16 %v75, %v74
  %v89 = vpack.c.b16 %v77, %v76
  %v90 = vpack.c.b16 %v79, %v78
  %v91 = vpack.c.b16 %v81, %v80
  %v92 = vpack.c.b16 %v83, %v82
  %v93 = vpack.c.b16 %v85, %v84
  %102 = vmatprep.subr.bf16.mxu0 0
  %103 = vmatpush1.bf16.msra.mxu0 %v93
  %104 = vmatprep.subr.bf16.mxu0 0
  %105 = vmatpush1.bf16.msra.mxu0 %v92
  %106 = vmatprep.subr.bf16.mxu0 0
  %107 = vmatpush1.bf16.msra.mxu0 %v91
  %108 = vmatprep.subr.bf16.mxu0 0
  %109 = vmatpush1.bf16.msra.mxu0 %v90
  %110 = vmatprep.subr.bf16.mxu0 0
  %111 = vmatpush1.bf16.msra.mxu0 %v89
  %112 = vmatprep.subr.bf16.mxu0 0
  %113 = vmatpush1.bf16.msra.mxu0 %v88
  %114 = vmatprep.subr.bf16.mxu0 0
  %115 = vmatpush1.bf16.msra.mxu0 %v87
  %116 = vmatprep.subr.bf16.mxu0 0
  %117 = vmatpush1.bf16.msra.mxu0 %v86
  %118 = vmatprep.subr.bf16.mxu0 0
  %119 = vmatpush2.bf16.msra.mxu0 0
  %120 = vmatprep.subr.bf16.mxu0 0
  %121 = vmatpush2.bf16.msra.mxu0 0
  %122 = vmatprep.subr.bf16.mxu0 0
  %123 = vmatpush2.bf16.msra.mxu0 0
  %124 = vmatprep.subr.bf16.mxu0 0
  %125 = vmatpush2.bf16.msra.mxu0 0
  %126 = vmatprep.subr.bf16.mxu0 0
  %127 = vmatpush2.bf16.msra.mxu0 0
  %128 = vmatprep.subr.bf16.mxu0 0
  %129 = vmatpush2.bf16.msra.mxu0 0
  %130 = vmatprep.subr.bf16.mxu0 0
  %131 = vmatpush2.bf16.msra.mxu0 0
  %132 = vmatprep.subr.bf16.mxu0 0
  %133 = vmatpush2.bf16.msra.mxu0 0
  %134 = vmatprep.mubr.bf16.mxu0 0
  %135 = vmatmul.mubr.bf16.gmra.mxu0 %v37
  %v136 = vpop.f32.mrf.mxu0
  %v137 = vadd.f32 0.0, %v136
  %v138 = vpop.f32.mrf.mxu0
  %v139 = vpop.f32.mrf.mxu0
  %v140 = vadd.f32 0.0, %v139
  %v141 = vpop.f32.mrf.mxu0
  %142 = vdwg.mxu0
  %v143 = vmax.f32 %v137, 0.0
  %v144 = vmax.f32 %v140, 0.0
  %145 = vst [vmem:[%s2] sm:$0xff] %v143
  %146 = vst [vmem:[%s2 + $0x8] sm:$0xff] %v144
  // Predicated region
  $region10: #{hgat_layer_forward.6} parent=0 // pred_check
    _
  $region11: #{hgat_layer_forward.6} parent=0 // pred_check_branch
    %148 = sbr.rel (0) target = $region13
  $region12: #{hgat_layer_forward.6} parent=0 // pred_region
    _
  $region13: #{hgat_layer_forward.6} parent=0 // pred_fallthru
    _
  // Predicated region
  $region14: #{hgat_layer_forward.6} parent=0 // pred_check
    _
  $region15: #{hgat_layer_forward.6} parent=0 // pred_check_branch
    %150 = sbr.rel (0) target = $region17
  $region16: #{hgat_layer_forward.6} parent=0 // pred_region
    _
  $region17: #{hgat_layer_forward.6} parent=0 // pred_fallthru
    _

// kernel: hgat_layer_forward.4
$region0: #{hgat_layer_forward.4}
  #allocation0 [shape = 'u32[]', space=smem, size = 0x4, offset = 0x4, fixed_abs, tag = 'smem constant byte address 0x4 - core index']
  #allocation1 [shape = 'u32[144,128]{1,0:T(1,128)}', space=vmem, size = 0x12000, scoped, tag = 'internal scratch']
  %s0 = inlined_call_operand.vmem [shape: bf16[16,128], index: 0, kind: input, shape index: {}]
  %s1 = inlined_call_operand.vmem [shape: bf16[128,128], index: 1, kind: input, shape index: {}]
  %s2 = inlined_call_operand.vmem [shape: bf16[16,128], index: 2, kind: output, shape index: {}]
  %s3 = sld [smem:[#allocation0]]
  $region18: #{hgat_layer_forward.4} parent=0
    _
  %s5 = ssub.s32 1, %s3
  %s6 = scalar_select 0, %s5, %s3
  // Predicated region
  $region2: #{hgat_layer_forward.4} parent=0 // pred_check
    _
  $region3: #{hgat_layer_forward.4} parent=0 // pred_check_branch
    %8 = sbr.rel (0) target = $region5
  $region4: #{hgat_layer_forward.4} parent=0 // pred_region
    _
  $region5: #{hgat_layer_forward.4} parent=0 // pred_fallthru
    _
  // Predicated region
  $region6: #{hgat_layer_forward.4} parent=0 // pred_check
    _
  $region7: #{hgat_layer_forward.4} parent=0 // pred_check_branch
    %10 = sbr.rel (0) target = $region9
  $region8: #{hgat_layer_forward.4} parent=0 // pred_region
    _
  $region9: #{hgat_layer_forward.4} parent=0 // pred_fallthru
    _
  %v12 = vld [vmem:[%s0] sm:$0xf]
  %v13 = vld [vmem:[%s0 + $0x4] sm:$0xf]
  %v14 = vld [vmem:[%s1] sm:$0xf]
  %v15 = vld [vmem:[%s1 + $0x4] sm:$0xf]
  %v16 = vld [vmem:[%s1 + $0x8] sm:$0xf]
  %v17 = vld [vmem:[%s1 + $0xc] sm:$0xf]
  %v18 = vld [vmem:[%s1 + $0x10] sm:$0xf]
  %v19 = vld [vmem:[%s1 + $0x14] sm:$0xf]
  %v20 = vld [vmem:[%s1 + $0x18] sm:$0xf]
  %v21 = vld [vmem:[%s1 + $0x1c] sm:$0xf]
  %v22 = vld [vmem:[%s1 + $0x20] sm:$0xf]
  %v23 = vld [vmem:[%s1 + $0x24] sm:$0xf]
  %v24 = vld [vmem:[%s1 + $0x28] sm:$0xf]
  %v25 = vld [vmem:[%s1 + $0x2c] sm:$0xf]
  %v26 = vld [vmem:[%s1 + $0x30] sm:$0xf]
  %v27 = vld [vmem:[%s1 + $0x34] sm:$0xf]
  %v28 = vld [vmem:[%s1 + $0x38] sm:$0xf]
  %v29 = vld [vmem:[%s1 + $0x3c] sm:$0xf]
  %v32 = vunpack.c.l.b16 %v12
  %v33 = vunpack.c.l.b16 %v13
  %v34 = vpack.c.b16 %v33, %v32
  %v52 = vunpack.c.l.b16 %v14
  %v53 = vunpack.c.l.b16 %v15
  %v54 = vunpack.c.l.b16 %v16
  %v55 = vunpack.c.l.b16 %v17
  %v56 = vunpack.c.l.b16 %v18
  %v57 = vunpack.c.l.b16 %v19
  %v58 = vunpack.c.l.b16 %v20
  %v59 = vunpack.c.l.b16 %v21
  %v60 = vunpack.c.l.b16 %v22
  %v61 = vunpack.c.l.b16 %v23
  %v62 = vunpack.c.l.b16 %v24
  %v63 = vunpack.c.l.b16 %v25
  %v64 = vunpack.c.l.b16 %v26
  %v65 = vunpack.c.l.b16 %v27
  %v66 = vunpack.c.l.b16 %v28
  %v67 = vunpack.c.l.b16 %v29
  %v68 = vpack.c.b16 %v53, %v52
  %v69 = vpack.c.b16 %v55, %v54
  %v70 = vpack.c.b16 %v57, %v56
  %v71 = vpack.c.b16 %v59, %v58
  %v72 = vpack.c.b16 %v61, %v60
  %v73 = vpack.c.b16 %v63, %v62
  %v74 = vpack.c.b16 %v65, %v64
  %v75 = vpack.c.b16 %v67, %v66
  %84 = vmatprep.subr.bf16.mxu0 0
  %85 = vmatpush1.bf16.msra.mxu0 %v75
  %86 = vmatprep.subr.bf16.mxu0 0
  %87 = vmatpush1.bf16.msra.mxu0 %v74
  %88 = vmatprep.subr.bf16.mxu0 0
  %89 = vmatpush1.bf16.msra.mxu0 %v73
  %90 = vmatprep.subr.bf16.mxu0 0
  %91 = vmatpush1.bf16.msra.mxu0 %v72
  %92 = vmatprep.subr.bf16.mxu0 0
  %93 = vmatpush1.bf16.msra.mxu0 %v71
  %94 = vmatprep.subr.bf16.mxu0 0
  %95 = vmatpush1.bf16.msra.mxu0 %v70
  %96 = vmatprep.subr.bf16.mxu0 0
  %97 = vmatpush1.bf16.msra.mxu0 %v69
  %98 = vmatprep.subr.bf16.mxu0 0
  %99 = vmatpush1.bf16.msra.mxu0 %v68
  %100 = vmatprep.subr.bf16.mxu0 0
  %101 = vmatpush2.bf16.msra.mxu0 0
  %102 = vmatprep.subr.bf16.mxu0 0
  %103 = vmatpush2.bf16.msra.mxu0 0
  %104 = vmatprep.subr.bf16.mxu0 0
  %105 = vmatpush2.bf16.msra.mxu0 0
  %106 = vmatprep.subr.bf16.mxu0 0
  %107 = vmatpush2.bf16.msra.mxu0 0
  %108 = vmatprep.subr.bf16.mxu0 0
  %109 = vmatpush2.bf16.msra.mxu0 0
  %110 = vmatprep.subr.bf16.mxu0 0
  %111 = vmatpush2.bf16.msra.mxu0 0
  %112 = vmatprep.subr.bf16.mxu0 0
  %113 = vmatpush2.bf16.msra.mxu0 0
  %114 = vmatprep.subr.bf16.mxu0 0
  %115 = vmatpush2.bf16.msra.mxu0 0
  %116 = vmatprep.mubr.bf16.mxu0 0
  %117 = vmatmul.mubr.bf16.gmra.mxu0 %v34
  %v118 = vpop.f32.mrf.mxu0
  %v119 = vadd.f32 0.0, %v118
  %v120 = vpop.f32.mrf.mxu0
  %v121 = vpop.f32.mrf.mxu0
  %v122 = vadd.f32 0.0, %v121
  %v123 = vpop.f32.mrf.mxu0
  %124 = vdwg.mxu0
  %v125 = vpack.c.bf16 %v122, %v119
  %v127 = vunpack.c.l.b16 %v125
  %v128 = vunpack.c.h.b16 %v125
  %v129 = vpack.c.b16 %v127, %v127
  %v130 = vpack.c.b16 %v128, %v128
  %133 = vst [vmem:[%s2] sm:$0xf] %v129
  %134 = vst [vmem:[%s2 + $0x4] sm:$0xf] %v130
  // Predicated region
  $region10: #{hgat_layer_forward.4} parent=0 // pred_check
    _
  $region11: #{hgat_layer_forward.4} parent=0 // pred_check_branch
    %136 = sbr.rel (0) target = $region13
  $region12: #{hgat_layer_forward.4} parent=0 // pred_region
    _
  $region13: #{hgat_layer_forward.4} parent=0 // pred_fallthru
    _
  // Predicated region
  $region14: #{hgat_layer_forward.4} parent=0 // pred_check
    _
  $region15: #{hgat_layer_forward.4} parent=0 // pred_check_branch
    %138 = sbr.rel (0) target = $region17
  $region16: #{hgat_layer_forward.4} parent=0 // pred_region
    _
  $region17: #{hgat_layer_forward.4} parent=0 // pred_fallthru
    _

// kernel: hgat_layer_forward.5
$region0: #{hgat_layer_forward.5}
  #allocation0 [shape = 'u32[]', space=smem, size = 0x4, offset = 0x4, fixed_abs, tag = 'smem constant byte address 0x4 - core index']
  #allocation1 [shape = 'u32[144,128]{1,0:T(1,128)}', space=vmem, size = 0x12000, scoped, tag = 'internal scratch']
  %s0 = inlined_call_operand.vmem [shape: f32[16,128], index: 0, kind: input, shape index: {}]
  %s1 = inlined_call_operand.vmem [shape: bf16[16,128], index: 1, kind: input, shape index: {}]
  %s2 = inlined_call_operand.vmem [shape: bf16[128,128], index: 2, kind: input, shape index: {}]
  %s3 = inlined_call_operand.vmem [shape: bf16[128,128], index: 3, kind: output, shape index: {}]
  %s4 = sld [smem:[#allocation0]]
  $region22: #{hgat_layer_forward.5} parent=0
    _
  %s6 = ssub.s32 1, %s4
  %s7 = scalar_select 0, %s6, %s4
  // Predicated region
  $region2: #{hgat_layer_forward.5} parent=0 // pred_check
    _
  $region3: #{hgat_layer_forward.5} parent=0 // pred_check_branch
    %9 = sbr.rel (0) target = $region5
  $region4: #{hgat_layer_forward.5} parent=0 // pred_region
    _
  $region5: #{hgat_layer_forward.5} parent=0 // pred_fallthru
    _
  // Predicated region
  $region6: #{hgat_layer_forward.5} parent=0 // pred_check
    _
  $region7: #{hgat_layer_forward.5} parent=0 // pred_check_branch
    %11 = sbr.rel (0) target = $region9
  $region8: #{hgat_layer_forward.5} parent=0 // pred_region
    _
  $region9: #{hgat_layer_forward.5} parent=0 // pred_fallthru
    _
  // Predicated region
  $region10: #{hgat_layer_forward.5} parent=0 // pred_check
    _
  $region11: #{hgat_layer_forward.5} parent=0 // pred_check_branch
    %13 = sbr.rel (0) target = $region13
  $region12: #{hgat_layer_forward.5} parent=0 // pred_region
    _
  $region13: #{hgat_layer_forward.5} parent=0 // pred_fallthru
    _
  %v15 = vld [vmem:[%s0] sm:$0xff]
  %v16 = vld [vmem:[%s0 + $0x8] sm:$0xff]
  %v17 = vlaneseq
  %v18 = vshrl.u32 %v17, 7
  %v19 = vadd.s32 %v18, 8
  %vm20 = vcmp.lt.s32.totalorder %v18, 16
  %vm21 = vcmp.lt.s32.totalorder %v19, 16
  %v22 = vsel %vm20, %v15, -1e+30
  %v23 = vsel %vm21, %v16, -1e+30
  %v24 = vmax.f32 %v22, %v23
  %v25 = vrot.slane %v24, 4
  %v26 = vmax.f32 %v24, %v25
  %v27 = vrot.slane %v26, 2
  %v28 = vmax.f32 %v26, %v27
  %v29 = vrot.slane %v28, 1
  %v30 = vmax.f32 %v28, %v29
  %v31 = vsub.f32 %v22, %v30
  %v32 = vsub.f32 %v23, %v30
  %v33 = vmul.f32 %v31, 1.442695
  %v34 = vpow.pop %v33
  %v35 = vmul.f32 %v32, 1.442695
  %v36 = vpow.pop %v35
  %v37 = vadd.f32 %v34, %v36
  %v38 = vrot.slane %v37, 4
  %v39 = vadd.f32 %v37, %v38
  %v40 = vrot.slane %v39, 2
  %v41 = vadd.f32 %v39, %v40
  %v42 = vrot.slane %v41, 1
  %v43 = vadd.f32 %v41, %v42
  %v44 = vrcp.pop %v43
  %v45 = vmul.f32 %v34, %v44
  %v46 = vmul.f32 %v36, %v44
  %v47 = vpack.c.bf16 %v46, %v45
  %v48 = vld [vmem:[%s1] sm:$0xf]
  %v49 = vld [vmem:[%s1 + $0x4] sm:$0xf]
  %50 = vxpose.xlu0.c.b16.start [1/8] %v47, 128
  %51 = vxpose.xlu0.c.b16.cont [2/8] 0, 128
  %52 = vxpose.xlu0.c.b16.cont [3/8] 0, 128
  %53 = vxpose.xlu0.c.b16.cont [4/8] 0, 128
  %54 = vxpose.xlu0.c.b16.cont [5/8] 0, 128
  %55 = vxpose.xlu0.c.b16.cont [6/8] 0, 128
  %56 = vxpose.xlu0.c.b16.cont [7/8] 0, 128
  %57 = vxpose.xlu0.c.b16.end [8/8] 0, 128
  %v58 = vpop.trf.xlu0
  %v59 = vpop.trf.xlu0
  %v60 = vpop.trf.xlu0
  %v61 = vpop.trf.xlu0
  %v62 = vpop.trf.xlu0
  %v63 = vpop.trf.xlu0
  %v64 = vpop.trf.xlu0
  %v65 = vpop.trf.xlu0
  %v68 = vunpack.c.l.b16 %v48
  %v69 = vunpack.c.l.b16 %v49
  %v70 = vpack.c.b16 %v69, %v68
  %vm72 = vcmask 130048
  %v74 = vsel %vm72, %v58, 0
  %v77 = vsel %vm72, %v59, 0
  %v80 = vsel %vm72, %v60, 0
  %v83 = vsel %vm72, %v61, 0
  %v86 = vsel %vm72, %v62, 0
  %v89 = vsel %vm72, %v63, 0
  %v92 = vsel %vm72, %v64, 0
  %v95 = vsel %vm72, %v65, 0
  %97 = vmatprep.subr.bf16.mxu0 0
  %98 = vmatpush1.bf16.msra.mxu0 0
  %99 = vmatprep.subr.bf16.mxu0 0
  %100 = vmatpush1.bf16.msra.mxu0 0
  %101 = vmatprep.subr.bf16.mxu0 0
  %102 = vmatpush1.bf16.msra.mxu0 0
  %103 = vmatprep.subr.bf16.mxu0 0
  %104 = vmatpush1.bf16.msra.mxu0 0
  %105 = vmatprep.subr.bf16.mxu0 0
  %106 = vmatpush1.bf16.msra.mxu0 0
  %107 = vmatprep.subr.bf16.mxu0 0
  %108 = vmatpush1.bf16.msra.mxu0 0
  %109 = vmatprep.subr.bf16.mxu0 0
  %110 = vmatpush1.bf16.msra.mxu0 0
  %111 = vmatprep.subr.bf16.mxu0 0
  %112 = vmatpush1.bf16.msra.mxu0 %v70
  %113 = vmatprep.subr.bf16.mxu0 0
  %114 = vmatpush2.bf16.msra.mxu0 0
  %115 = vmatprep.subr.bf16.mxu0 0
  %116 = vmatpush2.bf16.msra.mxu0 0
  %117 = vmatprep.subr.bf16.mxu0 0
  %118 = vmatpush2.bf16.msra.mxu0 0
  %119 = vmatprep.subr.bf16.mxu0 0
  %120 = vmatpush2.bf16.msra.mxu0 0
  %121 = vmatprep.subr.bf16.mxu0 0
  %122 = vmatpush2.bf16.msra.mxu0 0
  %123 = vmatprep.subr.bf16.mxu0 0
  %124 = vmatpush2.bf16.msra.mxu0 0
  %125 = vmatprep.subr.bf16.mxu0 0
  %126 = vmatpush2.bf16.msra.mxu0 0
  %127 = vmatprep.subr.bf16.mxu0 0
  %128 = vmatpush2.bf16.msra.mxu0 0
  %129 = vmatprep.mubr.bf16.mxu0 0
  %130 = vmatmul.mubr.bf16.gmra.mxu0 %v74
  %v131 = vpop.f32.mrf.mxu0
  %v132 = vadd.f32 0.0, %v131
  %v133 = vpop.f32.mrf.mxu0
  %v134 = vpop.f32.mrf.mxu0
  %v135 = vadd.f32 0.0, %v134
  %v136 = vpop.f32.mrf.mxu0
  %137 = vmatprep.mubr.bf16.mxu0 0
  %138 = vmatmul.mubr.bf16.gmra.mxu0 %v77
  %v139 = vpop.f32.mrf.mxu0
  %v140 = vadd.f32 0.0, %v139
  %v141 = vpop.f32.mrf.mxu0
  %v142 = vpop.f32.mrf.mxu0
  %v143 = vadd.f32 0.0, %v142
  %v144 = vpop.f32.mrf.mxu0
  %145 = vmatprep.mubr.bf16.mxu0 0
  %146 = vmatmul.mubr.bf16.gmra.mxu0 %v80
  %v147 = vpop.f32.mrf.mxu0
  %v148 = vadd.f32 0.0, %v147
  %v149 = vpop.f32.mrf.mxu0
  %v150 = vpop.f32.mrf.mxu0
  %v151 = vadd.f32 0.0, %v150
  %v152 = vpop.f32.mrf.mxu0
  %153 = vmatprep.mubr.bf16.mxu0 0
  %154 = vmatmul.mubr.bf16.gmra.mxu0 %v83
  %v155 = vpop.f32.mrf.mxu0
  %v156 = vadd.f32 0.0, %v155
  %v157 = vpop.f32.mrf.mxu0
  %v158 = vpop.f32.mrf.mxu0
  %v159 = vadd.f32 0.0, %v158
  %v160 = vpop.f32.mrf.mxu0
  %161 = vmatprep.mubr.bf16.mxu0 0
  %162 = vmatmul.mubr.bf16.gmra.mxu0 %v86
  %v163 = vpop.f32.mrf.mxu0
  %v164 = vadd.f32 0.0, %v163
  %v165 = vpop.f32.mrf.mxu0
  %v166 = vpop.f32.mrf.mxu0
  %v167 = vadd.f32 0.0, %v166
  %v168 = vpop.f32.mrf.mxu0
  %169 = vmatprep.mubr.bf16.mxu0 0
  %170 = vmatmul.mubr.bf16.gmra.mxu0 %v89
  %v171 = vpop.f32.mrf.mxu0
  %v172 = vadd.f32 0.0, %v171
  %v173 = vpop.f32.mrf.mxu0
  %v174 = vpop.f32.mrf.mxu0
  %v175 = vadd.f32 0.0, %v174
  %v176 = vpop.f32.mrf.mxu0
  %177 = vmatprep.mubr.bf16.mxu0 0
  %178 = vmatmul.mubr.bf16.gmra.mxu0 %v92
  %v179 = vpop.f32.mrf.mxu0
  %v180 = vadd.f32 0.0, %v179
  %v181 = vpop.f32.mrf.mxu0
  %v182 = vpop.f32.mrf.mxu0
  %v183 = vadd.f32 0.0, %v182
  %v184 = vpop.f32.mrf.mxu0
  %185 = vmatprep.mubr.bf16.mxu0 0
  %186 = vmatmul.mubr.bf16.gmra.mxu0 %v95
  %v187 = vpop.f32.mrf.mxu0
  %v188 = vadd.f32 0.0, %v187
  %v189 = vpop.f32.mrf.mxu0
  %v190 = vpop.f32.mrf.mxu0
  %v191 = vadd.f32 0.0, %v190
  %v192 = vpop.f32.mrf.mxu0
  %193 = vdwg.mxu0
  %v194 = vmax.f32 %v132, 0.0
  %v195 = vmax.f32 %v135, 0.0
  %v196 = vmax.f32 %v140, 0.0
  %v197 = vmax.f32 %v143, 0.0
  %v198 = vmax.f32 %v148, 0.0
  %v199 = vmax.f32 %v151, 0.0
  %v200 = vmax.f32 %v156, 0.0
  %v201 = vmax.f32 %v159, 0.0
  %v202 = vmax.f32 %v164, 0.0
  %v203 = vmax.f32 %v167, 0.0
  %v204 = vmax.f32 %v172, 0.0
  %v205 = vmax.f32 %v175, 0.0
  %v206 = vmax.f32 %v180, 0.0
  %v207 = vmax.f32 %v183, 0.0
  %v208 = vmax.f32 %v188, 0.0
  %v209 = vmax.f32 %v191, 0.0
  %v210 = vpack.c.bf16 %v195, %v194
  %v211 = vpack.c.bf16 %v197, %v196
  %v212 = vpack.c.bf16 %v199, %v198
  %v213 = vpack.c.bf16 %v201, %v200
  %v214 = vpack.c.bf16 %v203, %v202
  %v215 = vpack.c.bf16 %v205, %v204
  %v216 = vpack.c.bf16 %v207, %v206
  %v217 = vpack.c.bf16 %v209, %v208
  %v218 = vld [vmem:[%s2] sm:$0xf]
  %v219 = vld [vmem:[%s2 + $0x4] sm:$0xf]
  %v220 = vld [vmem:[%s2 + $0x8] sm:$0xf]
  %v221 = vld [vmem:[%s2 + $0xc] sm:$0xf]
  %v222 = vld [vmem:[%s2 + $0x10] sm:$0xf]
  %v223 = vld [vmem:[%s2 + $0x14] sm:$0xf]
  %v224 = vld [vmem:[%s2 + $0x18] sm:$0xf]
  %v225 = vld [vmem:[%s2 + $0x1c] sm:$0xf]
  %v226 = vld [vmem:[%s2 + $0x20] sm:$0xf]
  %v227 = vld [vmem:[%s2 + $0x24] sm:$0xf]
  %v228 = vld [vmem:[%s2 + $0x28] sm:$0xf]
  %v229 = vld [vmem:[%s2 + $0x2c] sm:$0xf]
  %v230 = vld [vmem:[%s2 + $0x30] sm:$0xf]
  %v231 = vld [vmem:[%s2 + $0x34] sm:$0xf]
  %v232 = vld [vmem:[%s2 + $0x38] sm:$0xf]
  %v233 = vld [vmem:[%s2 + $0x3c] sm:$0xf]
  %v250 = vunpack.c.l.b16 %v218
  %v251 = vunpack.c.l.b16 %v219
  %v252 = vunpack.c.l.b16 %v220
  %v253 = vunpack.c.l.b16 %v221
  %v254 = vunpack.c.l.b16 %v222
  %v255 = vunpack.c.l.b16 %v223
  %v256 = vunpack.c.l.b16 %v224
  %v257 = vunpack.c.l.b16 %v225
  %v258 = vunpack.c.l.b16 %v226
  %v259 = vunpack.c.l.b16 %v227
  %v260 = vunpack.c.l.b16 %v228
  %v261 = vunpack.c.l.b16 %v229
  %v262 = vunpack.c.l.b16 %v230
  %v263 = vunpack.c.l.b16 %v231
  %v264 = vunpack.c.l.b16 %v232
  %v265 = vunpack.c.l.b16 %v233
  %v266 = vpack.c.b16 %v251, %v250
  %v267 = vpack.c.b16 %v253, %v252
  %v268 = vpack.c.b16 %v255, %v254
  %v269 = vpack.c.b16 %v257, %v256
  %v270 = vpack.c.b16 %v259, %v258
  %v271 = vpack.c.b16 %v261, %v260
  %v272 = vpack.c.b16 %v263, %v262
  %v273 = vpack.c.b16 %v265, %v264
  %282 = vmatprep.subr.bf16.mxu0 0
  %283 = vmatpush1.bf16.msra.mxu0 %v273
  %284 = vmatprep.subr.bf16.mxu0 0
  %285 = vmatpush1.bf16.msra.mxu0 %v272
  %286 = vmatprep.subr.bf16.mxu0 0
  %287 = vmatpush1.bf16.msra.mxu0 %v271
  %288 = vmatprep.subr.bf16.mxu0 0
  %289 = vmatpush1.bf16.msra.mxu0 %v270
  %290 = vmatprep.subr.bf16.mxu0 0
  %291 = vmatpush1.bf16.msra.mxu0 %v269
  %292 = vmatprep.subr.bf16.mxu0 0
  %293 = vmatpush1.bf16.msra.mxu0 %v268
  %294 = vmatprep.subr.bf16.mxu0 0
  %295 = vmatpush1.bf16.msra.mxu0 %v267
  %296 = vmatprep.subr.bf16.mxu0 0
  %297 = vmatpush1.bf16.msra.mxu0 %v266
  %298 = vmatprep.subr.bf16.mxu0 0
  %299 = vmatpush2.bf16.msra.mxu0 0
  %300 = vmatprep.subr.bf16.mxu0 0
  %301 = vmatpush2.bf16.msra.mxu0 0
  %302 = vmatprep.subr.bf16.mxu0 0
  %303 = vmatpush2.bf16.msra.mxu0 0
  %304 = vmatprep.subr.bf16.mxu0 0
  %305 = vmatpush2.bf16.msra.mxu0 0
  %306 = vmatprep.subr.bf16.mxu0 0
  %307 = vmatpush2.bf16.msra.mxu0 0
  %308 = vmatprep.subr.bf16.mxu0 0
  %309 = vmatpush2.bf16.msra.mxu0 0
  %310 = vmatprep.subr.bf16.mxu0 0
  %311 = vmatpush2.bf16.msra.mxu0 0
  %312 = vmatprep.subr.bf16.mxu0 0
  %313 = vmatpush2.bf16.msra.mxu0 0
  %314 = vmatprep.mubr.bf16.mxu0 0
  %315 = vmatmul.mubr.bf16.gmra.mxu0 %v210
  %v316 = vpop.f32.mrf.mxu0
  %v317 = vadd.f32 0.0, %v316
  %v318 = vpop.f32.mrf.mxu0
  %v319 = vpop.f32.mrf.mxu0
  %v320 = vadd.f32 0.0, %v319
  %v321 = vpop.f32.mrf.mxu0
  %322 = vmatprep.mubr.bf16.mxu0 0
  %323 = vmatmul.mubr.bf16.gmra.mxu0 %v211
  %v324 = vpop.f32.mrf.mxu0
  %v325 = vadd.f32 0.0, %v324
  %v326 = vpop.f32.mrf.mxu0
  %v327 = vpop.f32.mrf.mxu0
  %v328 = vadd.f32 0.0, %v327
  %v329 = vpop.f32.mrf.mxu0
  %330 = vmatprep.mubr.bf16.mxu0 0
  %331 = vmatmul.mubr.bf16.gmra.mxu0 %v212
  %v332 = vpop.f32.mrf.mxu0
  %v333 = vadd.f32 0.0, %v332
  %v334 = vpop.f32.mrf.mxu0
  %v335 = vpop.f32.mrf.mxu0
  %v336 = vadd.f32 0.0, %v335
  %v337 = vpop.f32.mrf.mxu0
  %338 = vmatprep.mubr.bf16.mxu0 0
  %339 = vmatmul.mubr.bf16.gmra.mxu0 %v213
  %v340 = vpop.f32.mrf.mxu0
  %v341 = vadd.f32 0.0, %v340
  %v342 = vpop.f32.mrf.mxu0
  %v343 = vpop.f32.mrf.mxu0
  %v344 = vadd.f32 0.0, %v343
  %v345 = vpop.f32.mrf.mxu0
  %346 = vmatprep.mubr.bf16.mxu0 0
  %347 = vmatmul.mubr.bf16.gmra.mxu0 %v214
  %v348 = vpop.f32.mrf.mxu0
  %v349 = vadd.f32 0.0, %v348
  %v350 = vpop.f32.mrf.mxu0
  %v351 = vpop.f32.mrf.mxu0
  %v352 = vadd.f32 0.0, %v351
  %v353 = vpop.f32.mrf.mxu0
  %354 = vmatprep.mubr.bf16.mxu0 0
  %355 = vmatmul.mubr.bf16.gmra.mxu0 %v215
  %v356 = vpop.f32.mrf.mxu0
  %v357 = vadd.f32 0.0, %v356
  %v358 = vpop.f32.mrf.mxu0
  %v359 = vpop.f32.mrf.mxu0
  %v360 = vadd.f32 0.0, %v359
  %v361 = vpop.f32.mrf.mxu0
  %362 = vmatprep.mubr.bf16.mxu0 0
  %363 = vmatmul.mubr.bf16.gmra.mxu0 %v216
  %v364 = vpop.f32.mrf.mxu0
  %v365 = vadd.f32 0.0, %v364
  %v366 = vpop.f32.mrf.mxu0
  %v367 = vpop.f32.mrf.mxu0
  %v368 = vadd.f32 0.0, %v367
  %v369 = vpop.f32.mrf.mxu0
  %370 = vmatprep.mubr.bf16.mxu0 0
  %371 = vmatmul.mubr.bf16.gmra.mxu0 %v217
  %v372 = vpop.f32.mrf.mxu0
  %v373 = vadd.f32 0.0, %v372
  %v374 = vpop.f32.mrf.mxu0
  %v375 = vpop.f32.mrf.mxu0
  %v376 = vadd.f32 0.0, %v375
  %v377 = vpop.f32.mrf.mxu0
  %378 = vdwg.mxu0
  %v379 = vpack.c.bf16 %v320, %v317
  %v380 = vpack.c.bf16 %v328, %v325
  %v381 = vpack.c.bf16 %v336, %v333
  %v382 = vpack.c.bf16 %v344, %v341
  %v383 = vpack.c.bf16 %v352, %v349
  %v384 = vpack.c.bf16 %v360, %v357
  %v385 = vpack.c.bf16 %v368, %v365
  %v386 = vpack.c.bf16 %v376, %v373
  %v395 = vunpack.c.l.b16 %v379
  %v396 = vunpack.c.h.b16 %v379
  %v397 = vunpack.c.l.b16 %v380
  %v398 = vunpack.c.h.b16 %v380
  %v399 = vunpack.c.l.b16 %v381
  %v400 = vunpack.c.h.b16 %v381
  %v401 = vunpack.c.l.b16 %v382
  %v402 = vunpack.c.h.b16 %v382
  %v403 = vunpack.c.l.b16 %v383
  %v404 = vunpack.c.h.b16 %v383
  %v405 = vunpack.c.l.b16 %v384
  %v406 = vunpack.c.h.b16 %v384
  %v407 = vunpack.c.l.b16 %v385
  %v408 = vunpack.c.h.b16 %v385
  %v409 = vunpack.c.l.b16 %v386
  %v410 = vunpack.c.h.b16 %v386
  %v411 = vpack.c.b16 %v395, %v395
  %v412 = vpack.c.b16 %v396, %v396
  %v413 = vpack.c.b16 %v397, %v397
  %v414 = vpack.c.b16 %v398, %v398
  %v415 = vpack.c.b16 %v399, %v399
  %v416 = vpack.c.b16 %v400, %v400
  %v417 = vpack.c.b16 %v401, %v401
  %v418 = vpack.c.b16 %v402, %v402
  %v419 = vpack.c.b16 %v403, %v403
  %v420 = vpack.c.b16 %v404, %v404
  %v421 = vpack.c.b16 %v405, %v405
  %v422 = vpack.c.b16 %v406, %v406
  %v423 = vpack.c.b16 %v407, %v407
  %v424 = vpack.c.b16 %v408, %v408
  %v425 = vpack.c.b16 %v409, %v409
  %v426 = vpack.c.b16 %v410, %v410
  %443 = vst [vmem:[%s3] sm:$0xf] %v411
  %444 = vst [vmem:[%s3 + $0x4] sm:$0xf] %v412
  %445 = vst [vmem:[%s3 + $0x8] sm:$0xf] %v413
  %446 = vst [vmem:[%s3 + $0xc] sm:$0xf] %v414
  %447 = vst [vmem:[%s3 + $0x10] sm:$0xf] %v415
  %448 = vst [vmem:[%s3 + $0x14] sm:$0xf] %v416
  %449 = vst [vmem:[%s3 + $0x18] sm:$0xf] %v417
  %450 = vst [vmem:[%s3 + $0x1c] sm:$0xf] %v418
  %451 = vst [vmem:[%s3 + $0x20] sm:$0xf] %v419
  %452 = vst [vmem:[%s3 + $0x24] sm:$0xf] %v420
  %453 = vst [vmem:[%s3 + $0x28] sm:$0xf] %v421
  %454 = vst [vmem:[%s3 + $0x2c] sm:$0xf] %v422
  %455 = vst [vmem:[%s3 + $0x30] sm:$0xf] %v423
  %456 = vst [vmem:[%s3 + $0x34] sm:$0xf] %v424
  %457 = vst [vmem:[%s3 + $0x38] sm:$0xf] %v425
  %458 = vst [vmem:[%s3 + $0x3c] sm:$0xf] %v426
  // Predicated region
  $region14: #{hgat_layer_forward.5} parent=0 // pred_check
    _
  $region15: #{hgat_layer_forward.5} parent=0 // pred_check_branch
    %460 = sbr.rel (0) target = $region17
  $region16: #{hgat_layer_forward.5} parent=0 // pred_region
    _
  $region17: #{hgat_layer_forward.5} parent=0 // pred_fallthru
    _
  // Predicated region
  $region18: #{hgat_layer_forward.5} parent=0 // pred_check
    _
  $region19: #{hgat_layer_forward.5} parent=0 // pred_check_branch
    %462 = sbr.rel (0) target = $region21
  $region20: #{hgat_layer_forward.5} parent=0 // pred_region
    _
  $region21: #{hgat_layer_forward.5} parent=0 // pred_fallthru
    _

</llo_original>
